<compile_context>
chip_gen: v6e
topology: v6e:2x2x1
jax: 0.10.0
libtpu: 0.0.40
codegen_flags: <defaults>
</compile_context>

<pallas_src>
import jax
import jax.numpy as jnp
from jax import lax
from jax.experimental import pallas as pl
from jax.experimental.pallas import tpu as pltpu


def _round_up(x, m):
    return ((x + m - 1) // m) * m


# ----------------------------- Pallas kernel ---------------------------------
def prototex_kernel(h_ref, p_ref, p2_ref, wt_ref, b_ref, dist_ref, out_ref,
                    acc_hp, acc_h2):
    # h_ref : (tb, tk)          bf16  -- K-tile of flattened hidden states (streamed)
    # p_ref : (nk, P_pad, tk)   bf16  -- ALL flattened prototypes, VMEM-resident
    # p2_ref: (1, P_pad)        f32   -- precomputed ||p||^2 (bf16-consistent)
    # wt_ref: (P_pad, C_pad)    f32   -- classifier weight, pre-transposed, zero-padded
    # b_ref : (1, C_pad)        f32   -- classifier bias, zero-padded
    k = pl.program_id(1)

    @pl.when(k == 0)
    def _():
        acc_hp[...] = jnp.zeros_like(acc_hp)
        acc_h2[...] = jnp.zeros_like(acc_h2)

    h = h_ref[...]                      # (tb, tk)    bf16
    p = p_ref[k]                        # (P_pad, tk) bf16, K-tile of the resident block

    # Partial h @ p.T on the MXU (NT contraction, no explicit transpose), f32 accum.
    acc_hp[...] += lax.dot_general(
        h, p, (((1,), (1,)), ((), ())),
        preferred_element_type=jnp.float32)

    # Partial ||h||^2 accumulated in f32 (the f32 transient tb*tk*4 B is budgeted below).
    h32 = h.astype(jnp.float32)
    acc_h2[...] += jnp.sum(h32 * h32, axis=-1, keepdims=True)

    @pl.when(k == pl.num_programs(1) - 1)
    def _():
        # ||h||^2 + ||p||^2 - 2 h.p  (same formula torch.cdist uses in matmul mode).
        d2 = acc_h2[...] + p2_ref[...] - 2.0 * acc_hp[...]
        dist = jnp.sqrt(jnp.maximum(d2, 0.0))                       # (tb, P_pad)
        dist_ref[...] = dist
        # classfn_model(dist) = dist @ W^T + b  (W^T already passed in as wt).
        out_ref[...] = (jnp.dot(dist, wt_ref[...],
                                preferred_element_type=jnp.float32)
                        + b_ref[...])


# ---------------------- one-time parameter preprocessing ----------------------
def prototex_prepare_params(protos_flat, w, b, *, tk=None):
    """Hoisted out of the forward path: prototypes / classifier are fixed parameters.

    protos_flat: (P, K) f32, w: (C, P), b: (C,).
    Returns (p_tiles, p2, wt, b_pad), meta.
    """
    P, K = protos_flat.shape
    C = w.shape[0]

    K_lane = _round_up(K, 128)
    if tk is None:
        tk = min(8192, K_lane)          # large K-tiles for real Electra, fits all gens
    K_pad = _round_up(K_lane, tk)
    nk = K_pad // tk

    P_pad = _round_up(P, 16)            # bf16 sublane tile only -- NOT 128
    C_pad = _round_up(C, 128)           # lane-dense logits

    # bf16 prototypes, zero-padded, reshaped to (nk, P_pad, tk) so the kernel indexes
    # the K-tile on the leading axis of a single VMEM-resident block.
    p_pad = jnp.zeros((P_pad, K_pad), jnp.bfloat16).at[:P, :K].set(
        protos_flat.astype(jnp.bfloat16))
    p_tiles = p_pad.reshape(P_pad, nk, tk).transpose(1, 0, 2)       # (nk, P_pad, tk)

    # ||p||^2 from the bf16-rounded, zero-padded protos -- consistent with the kernel's
    # bf16 h.p^T.  Keep in sync if the bf16 cast is ever removed.
    p2 = jnp.sum(p_pad.astype(jnp.float32) ** 2, axis=-1).reshape(1, P_pad)

    # Classifier weight pre-transposed + zero-padded: padded rows MUST stay zero so the
    # garbage distance columns (from padded prototypes) contribute nothing to the logits.
    wt = jnp.zeros((P_pad, C_pad), jnp.float32).at[:P, :C].set(w.T.astype(jnp.float32))
    b_pad = jnp.zeros((1, C_pad), jnp.float32).at[0, :C].set(b.astype(jnp.float32))

    meta = dict(P=P, C=C, K=K, K_pad=K_pad, tk=tk, nk=nk, P_pad=P_pad, C_pad=C_pad)
    return (p_tiles, p2, wt, b_pad), meta


# --------------------------------- forward ------------------------------------
def prototex_forward_pallas(h_flat, params, meta, *, tb=None):
    """h_flat: (B, K) f32.  Returns (dist (B, P) f32, logits (B, C) f32)."""
    p_tiles, p2, wt, b_pad = params
    P, C = meta["P"], meta["C"]
    K, K_pad, tk, nk = meta["K"], meta["K_pad"], meta["tk"], meta["nk"]
    P_pad, C_pad = meta["P_pad"], meta["C_pad"]

    B = h_flat.shape[0]
    B_pad0 = _round_up(B, 8)
    if tb is None:
        if B_pad0 <= 16:
            tb = B_pad0                                  # single tiny tile (== full dim)
        elif B_pad0 <= 256:
            tb = _round_up(B_pad0 // 2, 16)              # >=2 tiles for v7x's two TCs
        else:
            tb = 128                                     # full MXU M tile, many tiles
    B_pad = _round_up(B_pad0, tb)
    nb = B_pad // tb

    # Pad / cast h only when needed (avoid an extra full HBM pass for aligned bf16 input).
    if h_flat.shape == (B_pad, K_pad) and h_flat.dtype == jnp.bfloat16:
        h_p = h_flat
    else:
        h_p = jnp.zeros((B_pad, K_pad), jnp.bfloat16).at[:B, :K].set(
            h_flat.astype(jnp.bfloat16))

    # VMEM working set: double-buffered h tile + resident proto block (+pipeline copy)
    # + the f32 square-sum transient + small f32 operands/outputs/accumulators.
    vmem_working = (2 * tb * tk * 2
                    + 2 * nk * P_pad * tk * 2
                    + tb * tk * 4
                    + 4 * (tb * P_pad + tb * C_pad + P_pad * C_pad + P_pad + C_pad) * 4)
    vmem_limit = max(32 << 20, min(48 << 20, _round_up(2 * vmem_working, 1 << 20)))

    flops = 2 * B_pad * P_pad * K_pad + 2 * B_pad * P_pad * C_pad
    bytes_accessed = (B_pad * K_pad * 2                  # h streamed once
                      + nk * P_pad * tk * 2              # protos DMA'd once (resident)
                      + (P_pad * C_pad + P_pad + C_pad) * 4
                      + B_pad * (P_pad + C_pad) * 4)

    dist, logits = pl.pallas_call(
        prototex_kernel,
        out_shape=(
            jax.ShapeDtypeStruct((B_pad, P_pad), jnp.float32),
            jax.ShapeDtypeStruct((B_pad, C_pad), jnp.float32),
        ),
        grid_spec=pltpu.PrefetchScalarGridSpec(
            num_scalar_prefetch=0,
            grid=(nb, nk),
            in_specs=[
                pl.BlockSpec((tb, tk), lambda i, k: (i, k)),            # h K-tile
                pl.BlockSpec((nk, P_pad, tk), lambda i, k: (0, 0, 0)),  # protos, resident
                pl.BlockSpec((1, P_pad), lambda i, k: (0, 0)),          # ||p||^2
                pl.BlockSpec((P_pad, C_pad), lambda i, k: (0, 0)),      # W^T
                pl.BlockSpec((1, C_pad), lambda i, k: (0, 0)),          # bias
            ],
            out_specs=(
                pl.BlockSpec((tb, P_pad), lambda i, k: (i, 0)),
                pl.BlockSpec((tb, C_pad), lambda i, k: (i, 0)),
            ),
            scratch_shapes=[
                pltpu.VMEM((tb, P_pad), jnp.float32),   # running h . p^T
                pltpu.VMEM((tb, 1), jnp.float32),       # running ||h||^2
            ],
        ),
        compiler_params=pltpu.CompilerParams(
            dimension_semantics=("parallel", "arbitrary"),
            vmem_limit_bytes=vmem_limit),
        cost_estimate=pl.CostEstimate(
            flops=flops, transcendentals=B_pad * P_pad,
            bytes_accessed=bytes_accessed),
    )(h_p, p_tiles, p2, wt, b_pad)

    return dist[:B, :P], logits[:B, :C]


# --------------------------- glue: electra stub -------------------------------
def electra_stub(input_ids, attn_mask, tok_emb, pos_emb):
    # Deterministic stand-in for ElectraModel(...).last_hidden_state
    x = jnp.take(tok_emb, input_ids, axis=0) + pos_emb[None, : input_ids.shape[1], :]
    mu = jnp.mean(x, axis=-1, keepdims=True)
    var = jnp.var(x, axis=-1, keepdims=True)
    x = (x - mu) * jax.lax.rsqrt(var + 1e-12)
    return x * attn_mask[..., None].astype(x.dtype)          # (B, L, D)


# ---------------------------------- main --------------------------------------
if __name__ == "__main__":
    # Small, module-consistent shapes
    B = 2                # batch
    L = 16               # max_position_embeddings (small synthetic value)
    D = 32               # electra hidden size
    VOCAB = 50
    NUM_PROTOS = 8
    NUM_POS = 4
    NUM_NEG = NUM_PROTOS - NUM_POS
    N_CLASSES = 14
    K = L * D

    key = jax.random.PRNGKey(0)
    k_tok, k_pos, k_posP, k_negP, k_w, k_b, k_ids = jax.random.split(key, 7)

    # Deterministic "parameters"
    tok_emb = jax.random.normal(k_tok, (VOCAB, D), jnp.float32) * 0.02
    pos_emb = jax.random.normal(k_pos, (L, D), jnp.float32) * 0.02
    pos_prototypes = jax.random.uniform(k_posP, (NUM_POS, L, D), jnp.float32)   # torch.rand
    neg_prototypes = jax.random.uniform(k_negP, (NUM_NEG, L, D), jnp.float32)
    w = jax.random.normal(k_w, (N_CLASSES, NUM_PROTOS), jnp.float32) * 0.1      # Linear weight
    b = jax.random.normal(k_b, (N_CLASSES,), jnp.float32) * 0.1                 # Linear bias

    # Inputs
    input_ids = jax.random.randint(k_ids, (B, L), 0, VOCAB, jnp.int32)
    attn_mask = jnp.ones((B, L), jnp.int32)

    # Forward (use_classfn=1 path, dobatchnorm=False, do_dropout=False)
    last_hidden_state = electra_stub(input_ids, attn_mask, tok_emb, pos_emb)    # (B, L, D)
    all_protos = jnp.concatenate([neg_prototypes, pos_prototypes], axis=0)      # (P, L, D)

    h_flat = last_hidden_state.reshape(B, K)
    p_flat = all_protos.reshape(NUM_PROTOS, K)

    # One-time parameter preprocessing (prototypes + classifier are fixed parameters).
    params, meta = prototex_prepare_params(p_flat, w, b)

    dist, classfn_out = prototex_forward_pallas(h_flat, params, meta)
    jax.block_until_ready(classfn_out)

    # Reference check with the same bf16-rounded operands the kernel consumes.
    h_q = h_flat.astype(jnp.bfloat16).astype(jnp.float32)
    p_q = p_flat.astype(jnp.bfloat16).astype(jnp.float32)
    d_ref = jnp.sqrt(jnp.maximum(
        jnp.sum(h_q ** 2, -1, keepdims=True)
        + jnp.sum(p_q ** 2, -1)[None, :]
        - 2.0 * h_q @ p_q.T, 0.0))
    out_ref = d_ref @ w.T + b[None, :]

    assert dist.shape == (B, NUM_PROTOS)
    assert classfn_out.shape == (B, N_CLASSES)
    assert jnp.allclose(dist, d_ref, atol=2e-3, rtol=2e-3)
    assert jnp.allclose(classfn_out, out_ref, atol=2e-3, rtol=2e-3)

    print("KERNEL_OK")
</pallas_src>

<mosaic_0001>
module attributes {stable_mosaic.version = 11 : i64} {
  func.func @prototex_kernel(%arg0: i32, %arg1: i32, %arg2: memref<8x512xbf16, #tpu.memory_space<vmem>>, %arg3: memref<1x16x512xbf16, #tpu.memory_space<vmem>>, %arg4: memref<1x16xf32, #tpu.memory_space<vmem>>, %arg5: memref<16x128xf32, #tpu.memory_space<vmem>>, %arg6: memref<1x128xf32, #tpu.memory_space<vmem>>, %arg7: memref<8x16xf32, #tpu.memory_space<vmem>>, %arg8: memref<8x128xf32, #tpu.memory_space<vmem>>, %arg9: memref<8x16xf32, #tpu.memory_space<vmem>>, %arg10: memref<8x1xf32, #tpu.memory_space<vmem>>) attributes {dimension_semantics = [#tpu.dimension_semantics<parallel>, #tpu.dimension_semantics<arbitrary>], iteration_bounds = array<i64: 1, 1>, scalar_prefetch = 0 : i64, scratch_operands = 2 : i64, tpu.core_type = #tpu.core_type<tc>, window_params = [{transform_indices = @transform_0, window_bounds = array<i64: 8, 512>}, {pipeline_mode = #tpu.pipeline_mode<synchronous>, transform_indices = @transform_1, window_bounds = array<i64: 1, 16, 512>}, {pipeline_mode = #tpu.pipeline_mode<synchronous>, transform_indices = @transform_2, window_bounds = array<i64: 1, 16>}, {pipeline_mode = #tpu.pipeline_mode<synchronous>, transform_indices = @transform_3, window_bounds = array<i64: 16, 128>}, {pipeline_mode = #tpu.pipeline_mode<synchronous>, transform_indices = @transform_4, window_bounds = array<i64: 1, 128>}, {transform_indices = @transform_5, window_bounds = array<i64: 8, 16>}, {transform_indices = @transform_6, window_bounds = array<i64: 8, 128>}]} {
    %c0_i32 = arith.constant 0 : i32
    %0 = arith.cmpi eq, %arg1, %c0_i32 : i32
    %1 = arith.extui %0 : i1 to i32
    %c0_i32_0 = arith.constant 0 : i32
    %2 = arith.cmpi ne, %1, %c0_i32_0 : i32
    scf.if %2 {
      %cst_15 = arith.constant 0.000000e+00 : f32
      %21 = vector.broadcast %cst_15 : f32 to vector<8x16xf32>
      %c0_16 = arith.constant 0 : index
      %c0_17 = arith.constant 0 : index
      %22 = vector.load %arg9[%c0_16, %c0_17] : memref<8x16xf32, #tpu.memory_space<vmem>>, vector<8x16xf32>
      tpu.vector_store %arg9[%c0_16, %c0_17], %21 {strides = array<i32>} : memref<8x16xf32, #tpu.memory_space<vmem>>, vector<8x16xf32>,
      %cst_18 = arith.constant 0.000000e+00 : f32
      %23 = vector.broadcast %cst_18 : f32 to vector<8x1xf32>
      %c0_19 = arith.constant 0 : index
      %c0_20 = arith.constant 0 : index
      %24 = vector.load %arg10[%c0_19, %c0_20] : memref<8x1xf32, #tpu.memory_space<vmem>>, vector<8x1xf32>
      tpu.vector_store %arg10[%c0_19, %c0_20], %23 {strides = array<i32>} : memref<8x1xf32, #tpu.memory_space<vmem>>, vector<8x1xf32>,
    } else {
    }
    %c0 = arith.constant 0 : index
    %c0_1 = arith.constant 0 : index
    %3 = vector.load %arg2[%c0, %c0_1] : memref<8x512xbf16, #tpu.memory_space<vmem>>, vector<8x512xbf16>
    %4 = arith.index_cast %arg1 : i32 to index
    %c0_2 = arith.constant 0 : index
    %c0_3 = arith.constant 0 : index
    %5 = vector.load %arg3[%4, %c0_2, %c0_3] : memref<1x16x512xbf16, #tpu.memory_space<vmem>>, vector<1x16x512xbf16>
    %6 = vector.shape_cast %5 : vector<1x16x512xbf16> to vector<16x512xbf16>
    %c0_4 = arith.constant 0 : index
    %c0_5 = arith.constant 0 : index
    %7 = vector.load %arg9[%c0_4, %c0_5] : memref<8x16xf32, #tpu.memory_space<vmem>>, vector<8x16xf32>
    %cst = arith.constant dense<0.000000e+00> : vector<8x16xf32>
    %8 = tpu.matmul %3, %6, %cst {dimension_numbers = #tpu.dot_dimension_numbers<[1], [1], [0], [0], [0, 0, 1, 0], [], []>} : vector<8x512xbf16>, vector<16x512xbf16>, vector<8x16xf32> -> vector<8x16xf32>
    %9 = arith.addf %7, %8 : vector<8x16xf32>
    %c0_6 = arith.constant 0 : index
    %c0_7 = arith.constant 0 : index
    %10 = vector.load %arg9[%c0_6, %c0_7] : memref<8x16xf32, #tpu.memory_space<vmem>>, vector<8x16xf32>
    tpu.vector_store %arg9[%c0_6, %c0_7], %9 {strides = array<i32>} : memref<8x16xf32, #tpu.memory_space<vmem>>, vector<8x16xf32>,
    %11 = arith.extf %3 : vector<8x512xbf16> to vector<8x512xf32>
    %c0_8 = arith.constant 0 : index
    %c0_9 = arith.constant 0 : index
    %12 = vector.load %arg10[%c0_8, %c0_9] : memref<8x1xf32, #tpu.memory_space<vmem>>, vector<8x1xf32>
    %13 = arith.mulf %11, %11 : vector<8x512xf32>
    %cst_10 = arith.constant dense<0.000000e+00> : vector<8xf32>
    %14 = vector.multi_reduction <add>, %13, %cst_10 [1] : vector<8x512xf32> to vector<8xf32>
    %15 = vector.shape_cast %14 : vector<8xf32> to vector<8x1xf32>
    %16 = arith.addf %12, %15 : vector<8x1xf32>
    %c0_11 = arith.constant 0 : index
    %c0_12 = arith.constant 0 : index
    %17 = vector.load %arg10[%c0_11, %c0_12] : memref<8x1xf32, #tpu.memory_space<vmem>>, vector<8x1xf32>
    tpu.vector_store %arg10[%c0_11, %c0_12], %16 {strides = array<i32>} : memref<8x1xf32, #tpu.memory_space<vmem>>, vector<8x1xf32>,
    %c0_i32_13 = arith.constant 0 : i32
    %18 = arith.cmpi eq, %arg1, %c0_i32_13 : i32
    %19 = arith.extui %18 : i1 to i32
    %c0_i32_14 = arith.constant 0 : i32
    %20 = arith.cmpi ne, %19, %c0_i32_14 : i32
    scf.if %20 {
      %c0_15 = arith.constant 0 : index
      %c0_16 = arith.constant 0 : index
      %21 = vector.load %arg10[%c0_15, %c0_16] : memref<8x1xf32, #tpu.memory_space<vmem>>, vector<8x1xf32>
      %c0_17 = arith.constant 0 : index
      %c0_18 = arith.constant 0 : index
      %22 = vector.load %arg4[%c0_17, %c0_18] : memref<1x16xf32, #tpu.memory_space<vmem>>, vector<1x16xf32>
      %23 = vector.broadcast %21 : vector<8x1xf32> to vector<8x16xf32>
      %24 = vector.broadcast %22 : vector<1x16xf32> to vector<8x16xf32>
      %25 = arith.addf %23, %24 : vector<8x16xf32>
      %c0_19 = arith.constant 0 : index
      %c0_20 = arith.constant 0 : index
      %26 = vector.load %arg9[%c0_19, %c0_20] : memref<8x16xf32, #tpu.memory_space<vmem>>, vector<8x16xf32>
      %cst_21 = arith.constant 2.000000e+00 : f32
      %27 = vector.broadcast %cst_21 : f32 to vector<8x16xf32>
      %28 = arith.mulf %27, %26 : vector<8x16xf32>
      %29 = arith.subf %25, %28 : vector<8x16xf32>
      %cst_22 = arith.constant 0.000000e+00 : f32
      %30 = vector.broadcast %cst_22 : f32 to vector<8x16xf32>
      %31 = arith.maximumf %29, %30 : vector<8x16xf32>
      %32 = math.sqrt %31 : vector<8x16xf32>
      %c0_23 = arith.constant 0 : index
      %c0_24 = arith.constant 0 : index
      %33 = vector.load %arg7[%c0_23, %c0_24] : memref<8x16xf32, #tpu.memory_space<vmem>>, vector<8x16xf32>
      tpu.vector_store %arg7[%c0_23, %c0_24], %32 {strides = array<i32>} : memref<8x16xf32, #tpu.memory_space<vmem>>, vector<8x16xf32>,
      %c0_25 = arith.constant 0 : index
      %c0_26 = arith.constant 0 : index
      %34 = vector.load %arg5[%c0_25, %c0_26] : memref<16x128xf32, #tpu.memory_space<vmem>>, vector<16x128xf32>
      %cst_27 = arith.constant dense<0.000000e+00> : vector<8x128xf32>
      %35 = tpu.matmul %32, %34, %cst_27 {dimension_numbers = #tpu.dot_dimension_numbers<[1], [0], [0], [1], [0, 0, 1, 1], [], []>} : vector<8x16xf32>, vector<16x128xf32>, vector<8x128xf32> -> vector<8x128xf32>
      %c0_28 = arith.constant 0 : index
      %c0_29 = arith.constant 0 : index
      %36 = vector.load %arg6[%c0_28, %c0_29] : memref<1x128xf32, #tpu.memory_space<vmem>>, vector<1x128xf32>
      %37 = vector.broadcast %36 : vector<1x128xf32> to vector<8x128xf32>
      %38 = arith.addf %35, %37 : vector<8x128xf32>
      %c0_30 = arith.constant 0 : index
      %c0_31 = arith.constant 0 : index
      %39 = vector.load %arg8[%c0_30, %c0_31] : memref<8x128xf32, #tpu.memory_space<vmem>>, vector<8x128xf32>
      tpu.vector_store %arg8[%c0_30, %c0_31], %38 {strides = array<i32>} : memref<8x128xf32, #tpu.memory_space<vmem>>, vector<8x128xf32>,
    } else {
    }
    return
  }
  func.func @transform_0(%arg0: i32, %arg1: i32) -> (i32, i32) {
    %c0_i32 = arith.constant 0 : i32
    return %arg0, %arg1 : i32, i32
  }
  func.func @transform_1(%arg0: i32, %arg1: i32) -> (i32, i32, i32) {
    %c0_i32 = arith.constant 0 : i32
    %c0_i32_0 = arith.constant 0 : i32
    %c0_i32_1 = arith.constant 0 : i32
    %c0_i32_2 = arith.constant 0 : i32
    return %c0_i32, %c0_i32_0, %c0_i32_1 : i32, i32, i32
  }
  func.func @transform_2(%arg0: i32, %arg1: i32) -> (i32, i32) {
    %c0_i32 = arith.constant 0 : i32
    %c0_i32_0 = arith.constant 0 : i32
    %c0_i32_1 = arith.constant 0 : i32
    return %c0_i32, %c0_i32_0 : i32, i32
  }
  func.func @transform_3(%arg0: i32, %arg1: i32) -> (i32, i32) {
    %c0_i32 = arith.constant 0 : i32
    %c0_i32_0 = arith.constant 0 : i32
    %c0_i32_1 = arith.constant 0 : i32
    return %c0_i32, %c0_i32_0 : i32, i32
  }
  func.func @transform_4(%arg0: i32, %arg1: i32) -> (i32, i32) {
    %c0_i32 = arith.constant 0 : i32
    %c0_i32_0 = arith.constant 0 : i32
    %c0_i32_1 = arith.constant 0 : i32
    return %c0_i32, %c0_i32_0 : i32, i32
  }
  func.func @transform_5(%arg0: i32, %arg1: i32) -> (i32, i32) {
    %c0_i32 = arith.constant 0 : i32
    %c0_i32_0 = arith.constant 0 : i32
    return %arg0, %c0_i32 : i32, i32
  }
  func.func @transform_6(%arg0: i32, %arg1: i32) -> (i32, i32) {
    %c0_i32 = arith.constant 0 : i32
    %c0_i32_0 = arith.constant 0 : i32
    return %arg0, %c0_i32 : i32, i32
  }
}

</mosaic_0001>

<llo_original>
// kernel: tpu_custom_call.1
$region0: #{tpu_custom_call.1}
  #allocation0 [shape = 'u32[]', space=smem, size = 0x4, offset = 0x4, fixed_abs, tag = 'smem constant byte address 0x4 - core index']
  #allocation1 [shape = 'u32[144,128]{1,0:T(1,128)}', space=vmem, size = 0x12000, scoped, tag = 'internal scratch']
  #allocation2 [shape = 'f32[8,16]{1,0:T(8,128)}', space=vmem, size = 0x1000, scoped, tag = 'scratch operand']
  #allocation3 [shape = 'f32[8,1]{1,0:T(8,128)}', space=vmem, size = 0x1000, scoped, tag = 'scratch operand']
  %s0 = inlined_call_operand.hbm [shape: bf16[8,512], index: 0, kind: input, shape index: {}]
  %s1 = inlined_call_operand.hbm [shape: bf16[1,16,512], index: 1, kind: input, shape index: {}]
  %s2 = inlined_call_operand.vmem [shape: f32[1,16], index: 2, kind: input, shape index: {}]
  %s3 = inlined_call_operand.hbm [shape: f32[16,128], index: 3, kind: input, shape index: {}]
  %s4 = inlined_call_operand.vmem [shape: f32[1,128], index: 4, kind: input, shape index: {}]
  %s5 = inlined_call_operand.hbm [shape: f32[8,16], index: 5, kind: output, shape index: {0}]
  %s6 = inlined_call_operand.hbm [shape: f32[8,128], index: 6, kind: output, shape index: {1}]
  %7 = xla_tuple %s5, %s6
  %s8 = sld [smem:[#allocation0]]
  $region58: #{tpu_custom_call.1} parent=0
    _
  %s10 = ssub.s32 1, %s8
  %s11 = scalar_select 0, %s10, %s8
  $region1: #{tpu_custom_call.1} parent=0
    #allocation4 [shape = 'u8[8192]{0}', space=vmem, size = 0x2000, scoped, tag = 'input window, operand 0, single buffered']
    #allocation5 [shape = 's32[1]{0}', space=sflag, size = 0x4, scoped, tag = 'scoped memory for tpu_custom_call.1']
    #allocation6 [shape = 's32[1]{0}', space=sflag, size = 0x4, scoped, tag = 'scoped memory for tpu_custom_call.1']
    #allocation7 [shape = 'u8[16384]{0}', space=vmem, size = 0x4000, scoped, tag = 'input window, operand 1, single buffered']
    #allocation8 [shape = 's32[1]{0}', space=sflag, size = 0x4, scoped, tag = 'scoped memory for tpu_custom_call.1']
    #allocation9 [shape = 'u8[8192]{0}', space=vmem, size = 0x2000, scoped, tag = 'input window, operand 3, single buffered']
    #allocation10 [shape = 'u8[4096]{0}', space=vmem, size = 0x1000, scoped, tag = 'output window, operand 0, single buffered']
    #allocation11 [shape = 'u8[4096]{0}', space=vmem, size = 0x1000, scoped, tag = 'output window, operand 1, single buffered']
    #allocation12 [shape = 's32[1]{0}', space=sflag, size = 0x4, scoped, tag = 'scoped memory for tpu_custom_call.1']
    %12 = vsyncpa [#allocation5], 0
    %13 = vsyncpa [#allocation8], 0
    %14 = vsyncpa [#allocation6], 0
    %15 = vsyncpa [#allocation12], 0
    // Predicated region
    $region2: #{tpu_custom_call.1} parent=1 // pred_check
      _
    $region3: #{tpu_custom_call.1} parent=1 // pred_check_branch
      %17 = sbr.rel (0) target = $region5
    $region4: #{tpu_custom_call.1} parent=1 // pred_region
      %s19 = ssub.s32 256, 256
      %20 = vsyncadd [#allocation5], %s19
      %s22 = sshll.u32 [#allocation4], 4
      %s23 = int_to_ptr.vmem [resolvable:$true] %s22
      %25 = dma.hbm_to_vmem [thread:$0]  %s0, 256, %s23, [#allocation5]
    $region5: #{tpu_custom_call.1} parent=1 // pred_fallthru
      _
    // Predicated region
    $region6: #{tpu_custom_call.1} parent=1 // pred_check
      _
    $region7: #{tpu_custom_call.1} parent=1 // pred_check_branch
      %27 = sbr.rel (0) target = $region9
    $region8: #{tpu_custom_call.1} parent=1 // pred_region
      %s29 = ssub.s32 512, 512
      %30 = vsyncadd [#allocation8], %s29
      %s31 = sshll.u32 [#allocation7], 4
      %s32 = int_to_ptr.vmem [resolvable:$true] %s31
      %37 = dma.hbm_to_vmem [thread:$0]  %s1, 512, %s32, [#allocation8], 256, 256, 16
    $region9: #{tpu_custom_call.1} parent=1 // pred_fallthru
      _
    // Predicated region
    $region10: #{tpu_custom_call.1} parent=1 // pred_check
      _
    $region11: #{tpu_custom_call.1} parent=1 // pred_check_branch
      %39 = sbr.rel (0) target = $region13
    $region12: #{tpu_custom_call.1} parent=1 // pred_region
      _
    $region13: #{tpu_custom_call.1} parent=1 // pred_fallthru
      _
    // Predicated region
    $region14: #{tpu_custom_call.1} parent=1 // pred_check
      _
    $region15: #{tpu_custom_call.1} parent=1 // pred_check_branch
      %41 = sbr.rel (0) target = $region17
    $region16: #{tpu_custom_call.1} parent=1 // pred_region
      %s43 = ssub.s32 256, 256
      %44 = vsyncadd [#allocation8], %s43
      %s45 = sshll.u32 [#allocation9], 4
      %s46 = int_to_ptr.vmem [resolvable:$true] %s45
      %51 = dma.hbm_to_vmem [thread:$0]  %s3, 256, %s46, [#allocation8], 128, 128, 8
    $region17: #{tpu_custom_call.1} parent=1 // pred_fallthru
      _
    // Predicated region
    $region18: #{tpu_custom_call.1} parent=1 // pred_check
      _
    $region19: #{tpu_custom_call.1} parent=1 // pred_check_branch
      %53 = sbr.rel (0) target = $region21
    $region20: #{tpu_custom_call.1} parent=1 // pred_region
      _
    $region21: #{tpu_custom_call.1} parent=1 // pred_fallthru
      _
    // Predicated region
    $region22: #{tpu_custom_call.1} parent=1 // pred_check
      _
    $region23: #{tpu_custom_call.1} parent=1 // pred_check_branch
      %55 = sbr.rel (0) target = $region25
    $region24: #{tpu_custom_call.1} parent=1 // pred_region
      %56 = dma.done [#allocation5], 256
    $region25: #{tpu_custom_call.1} parent=1 // pred_fallthru
      _
    // Predicated region
    $region26: #{tpu_custom_call.1} parent=1 // pred_check
      _
    $region27: #{tpu_custom_call.1} parent=1 // pred_check_branch
      %58 = sbr.rel (0) target = $region29
    $region28: #{tpu_custom_call.1} parent=1 // pred_region
      %59 = dma.done [#allocation8], 512
    $region29: #{tpu_custom_call.1} parent=1 // pred_fallthru
      _
    // Predicated region
    $region30: #{tpu_custom_call.1} parent=1 // pred_check
      _
    $region31: #{tpu_custom_call.1} parent=1 // pred_check_branch
      %61 = sbr.rel (0) target = $region33
    $region32: #{tpu_custom_call.1} parent=1 // pred_region
      %62 = dma.done [#allocation8], 256
    $region33: #{tpu_custom_call.1} parent=1 // pred_fallthru
      _
    %p64 = scmp.eq.s32.totalorder 0, 0
    // Predicated region
    $region34: #{tpu_custom_call.1} parent=1 // pred_check
      %p65 = pneg %p64
    $region35: #{tpu_custom_call.1} parent=1 // pred_check_branch
      %67 = sbr.rel (%p65) target = $region37
    $region36: #{tpu_custom_call.1} parent=1 // pred_region
      %vm68 = vcmask 130048
      %69 = vst.msk [vmem:[#allocation2] sm:$0xff] %vm68, 0.0
      %vm70 = vcmask 7168
      %71 = vst.msk [vmem:[#allocation3] sm:$0xff] %vm70, 0.0
    $region37: #{tpu_custom_call.1} parent=1 // pred_fallthru
      _
    %v72 = vld [vmem:[#allocation4] sm:$0xff]
    %v73 = vld [vmem:[#allocation4 + $0x8] sm:$0xff]
    %s74 = smul.u32 0, 8
    %s75 = smul.addr %s74, 4
    %s76 = scalar_lea.vmem [#allocation7], %s75
    %v77 = vld [vmem:[%s76] sm:$0xff]
    %v78 = vld [vmem:[%s76 + $0x8] sm:$0xff]
    %v79 = vld [vmem:[%s76 + $0x10] sm:$0xff]
    %v80 = vld [vmem:[%s76 + $0x18] sm:$0xff]
    %v81 = vld [vmem:[#allocation2] sm:$0xff]
    %v84 = vunpack.c.l.b16 %v72
    %v85 = vunpack.c.h.b16 %v72
    %v86 = vunpack.c.l.b16 %v73
    %v87 = vunpack.c.h.b16 %v73
    %v88 = vpack.c.b16 %v84, %v84
    %v89 = vpack.c.b16 %v85, %v85
    %v90 = vpack.c.b16 %v86, %v86
    %v91 = vpack.c.b16 %v87, %v87
    %v100 = vunpack.c.l.b16 %v77
    %v101 = vunpack.c.h.b16 %v77
    %v102 = vunpack.c.l.b16 %v78
    %v103 = vunpack.c.h.b16 %v78
    %v104 = vunpack.c.l.b16 %v79
    %v105 = vunpack.c.h.b16 %v79
    %v106 = vunpack.c.l.b16 %v80
    %v107 = vunpack.c.h.b16 %v80
    %v108 = vpack.c.b16 %v104, %v100
    %v109 = vpack.c.b16 %v105, %v101
    %v110 = vpack.c.b16 %v106, %v102
    %v111 = vpack.c.b16 %v107, %v103
    %116 = vmatprep.subr.bf16.mxu0 0
    %117 = vmatpush1.bf16.xpose.msra.mxu0 0
    %118 = vmatprep.subr.bf16.mxu0 0
    %119 = vmatpush1.bf16.xpose.msra.mxu0 0
    %120 = vmatprep.subr.bf16.mxu0 0
    %121 = vmatpush1.bf16.xpose.msra.mxu0 0
    %122 = vmatprep.subr.bf16.mxu0 0
    %123 = vmatpush1.bf16.xpose.msra.mxu0 0
    %124 = vmatprep.subr.bf16.mxu0 0
    %125 = vmatpush1.bf16.xpose.msra.mxu0 0
    %126 = vmatprep.subr.bf16.mxu0 0
    %127 = vmatpush1.bf16.xpose.msra.mxu0 0
    %128 = vmatprep.subr.bf16.mxu0 0
    %129 = vmatpush1.bf16.xpose.msra.mxu0 0
    %130 = vmatprep.subr.bf16.mxu0 %v109
    %131 = vmatpush1.bf16.xpose.msra.mxu0 %v108
    %132 = vmatprep.subr.bf16.mxu0 0
    %133 = vmatpush2.bf16.xpose.msra.mxu0 0
    %134 = vmatprep.subr.bf16.mxu0 0
    %135 = vmatpush2.bf16.xpose.msra.mxu0 0
    %136 = vmatprep.subr.bf16.mxu0 0
    %137 = vmatpush2.bf16.xpose.msra.mxu0 0
    %138 = vmatprep.subr.bf16.mxu0 0
    %139 = vmatpush2.bf16.xpose.msra.mxu0 0
    %140 = vmatprep.subr.bf16.mxu0 0
    %141 = vmatpush2.bf16.xpose.msra.mxu0 0
    %142 = vmatprep.subr.bf16.mxu0 0
    %143 = vmatpush2.bf16.xpose.msra.mxu0 0
    %144 = vmatprep.subr.bf16.mxu0 0
    %145 = vmatpush2.bf16.xpose.msra.mxu0 0
    %146 = vmatprep.subr.bf16.mxu0 0
    %147 = vmatpush2.bf16.xpose.msra.mxu0 0
    %148 = vmatprep.mubr.bf16.mxu0 %v89
    %149 = vmatmul.mubr.bf16.gmra.mxu0 %v88
    %v150 = vpop.f32.mrf.mxu0
    %v151 = vadd.f32 0.0, %v150
    %v152 = vpop.f32.mrf.mxu0
    %v153 = vpop.f32.mrf.mxu0
    %v154 = vpop.f32.mrf.mxu0
    %155 = vdwg.mxu0
    %156 = vmatprep.subr.bf16.mxu0 0
    %157 = vmatpush1.bf16.xpose.msra.mxu0 0
    %158 = vmatprep.subr.bf16.mxu0 0
    %159 = vmatpush1.bf16.xpose.msra.mxu0 0
    %160 = vmatprep.subr.bf16.mxu0 0
    %161 = vmatpush1.bf16.xpose.msra.mxu0 0
    %162 = vmatprep.subr.bf16.mxu0 0
    %163 = vmatpush1.bf16.xpose.msra.mxu0 0
    %164 = vmatprep.subr.bf16.mxu0 0
    %165 = vmatpush1.bf16.xpose.msra.mxu0 0
    %166 = vmatprep.subr.bf16.mxu0 0
    %167 = vmatpush1.bf16.xpose.msra.mxu0 0
    %168 = vmatprep.subr.bf16.mxu0 0
    %169 = vmatpush1.bf16.xpose.msra.mxu0 0
    %170 = vmatprep.subr.bf16.mxu0 %v111
    %171 = vmatpush1.bf16.xpose.msra.mxu0 %v110
    %172 = vmatprep.subr.bf16.mxu0 0
    %173 = vmatpush2.bf16.xpose.msra.mxu0 0
    %174 = vmatprep.subr.bf16.mxu0 0
    %175 = vmatpush2.bf16.xpose.msra.mxu0 0
    %176 = vmatprep.subr.bf16.mxu0 0
    %177 = vmatpush2.bf16.xpose.msra.mxu0 0
    %178 = vmatprep.subr.bf16.mxu0 0
    %179 = vmatpush2.bf16.xpose.msra.mxu0 0
    %180 = vmatprep.subr.bf16.mxu0 0
    %181 = vmatpush2.bf16.xpose.msra.mxu0 0
    %182 = vmatprep.subr.bf16.mxu0 0
    %183 = vmatpush2.bf16.xpose.msra.mxu0 0
    %184 = vmatprep.subr.bf16.mxu0 0
    %185 = vmatpush2.bf16.xpose.msra.mxu0 0
    %186 = vmatprep.subr.bf16.mxu0 0
    %187 = vmatpush2.bf16.xpose.msra.mxu0 0
    %188 = vmatprep.mubr.bf16.mxu0 %v91
    %189 = vmatmul.mubr.bf16.gmra.mxu0 %v90
    %v190 = vpop.f32.mrf.mxu0
    %v191 = vadd.f32 %v151, %v190
    %v192 = vpop.f32.mrf.mxu0
    %v193 = vpop.f32.mrf.mxu0
    %v194 = vpop.f32.mrf.mxu0
    %195 = vdwg.mxu0
    %v196 = vadd.f32 %v81, %v191
    %vm197 = vcmask 130048
    %198 = vst.msk [vmem:[#allocation2] sm:$0xff] %vm197, %v196
    %v199 = vunpack.c.l.bf16 %v72
    %v200 = vunpack.c.h.bf16 %v72
    %v201 = vunpack.c.l.bf16 %v73
    %v202 = vunpack.c.h.bf16 %v73
    %v203 = vld [vmem:[#allocation3] sm:$0xff]
    %v204 = vmul.f32 %v199, %v199
    %v205 = vmul.f32 %v200, %v200
    %v206 = vmul.f32 %v201, %v201
    %v207 = vmul.f32 %v202, %v202
    %v208 = vadd.f32 %v204, %v205
    %v209 = vadd.f32 %v208, %v206
    %v210 = vadd.f32 %v209, %v207
    %211 = vadd.xlane.f32.xlu0 %v210
    %v212 = vpop.xlane.xlu0 %211
    %v213 = vadd.f32 %v203, %v212
    %vm214 = vcmask 7168
    %215 = vst.msk [vmem:[#allocation3] sm:$0xff] %vm214, %v213
    // Predicated region
    $region38: #{tpu_custom_call.1} parent=1 // pred_check
      %p216 = pneg %p64
    $region39: #{tpu_custom_call.1} parent=1 // pred_check_branch
      %218 = sbr.rel (%p216) target = $region41
    $region40: #{tpu_custom_call.1} parent=1 // pred_region
      %v219 = vld [vmem:[#allocation3] sm:$0xff]
      %v220 = vld [vmem:[%s2] sm:$0x1]
      %222 = vset.pattern.permute.xlu0 0
      %223 = vperm.xlu0 %222, %v219
      %v224 = vpop.permute.xlu0 %223
      %v227 = vlaneseq
      %v228 = vshrl.u32 %v227, 7
      %v229 = vsub.s32 0, %v228
      %v230 = vrot.slane %v220, %v229
      %v232 = vadd.f32 %v224, %v230
      %v233 = vld [vmem:[#allocation2] sm:$0xff]
      %v234 = vmul.f32 %v233, 2.0
      %v235 = vsub.f32 %v232, %v234
      %v236 = vmax.f32 %v235, 0.0
      %v237 = vrsqrt.pop %v236
      %v238 = vmul.f32 %v236, %v237
      %vm239 = vcmp.eq.f32.partialorder %v236, inf
      %v240 = vsel %vm239, %v236, %v238
      %vm241 = vcmp.eq.f32.partialorder %v236, 0.0
      %v242 = vand.u32 %v236, 2147483648
      %v243 = vsel %vm241, %v242, %v240
      %244 = vst.msk [vmem:[#allocation10] sm:$0xff] %vm197, %v243
      %v245 = vld [vmem:[#allocation9] sm:$0xff]
      %v246 = vld [vmem:[#allocation9 + $0x8] sm:$0xff]
      %v247 = vld [vmem:[%s4] sm:$0x1]
      %v249 = vlaneseq
      %v250 = vshrl.u32 %v249, 7
      %v251 = vsub.s32 0, %v250
      %v252 = vrot.slane %v247, %v251
      %v255 = vsel %vm197, %v243, 0
      %257 = vmatprep.subr.mxu0 0.0
      %258 = vmatpush1.msra.mxu0 0.0
      %259 = vmatprep.subr.mxu0 0.0
      %260 = vmatpush1.msra.mxu0 0.0
      %261 = vmatprep.subr.mxu0 0.0
      %262 = vmatpush1.msra.mxu0 0.0
      %263 = vmatprep.subr.mxu0 0.0
      %264 = vmatpush1.msra.mxu0 0.0
      %265 = vmatprep.subr.mxu0 0.0
      %266 = vmatpush1.msra.mxu0 0.0
      %267 = vmatprep.subr.mxu0 0.0
      %268 = vmatpush1.msra.mxu0 0.0
      %269 = vmatprep.subr.mxu0 0.0
      %270 = vmatpush1.msra.mxu0 0.0
      %271 = vmatprep.subr.mxu0 0.0
      %272 = vmatpush1.msra.mxu0 0.0
      %273 = vmatprep.subr.mxu0 0.0
      %274 = vmatpush1.msra.mxu0 0.0
      %275 = vmatprep.subr.mxu0 0.0
      %276 = vmatpush1.msra.mxu0 0.0
      %277 = vmatprep.subr.mxu0 0.0
      %278 = vmatpush1.msra.mxu0 0.0
      %279 = vmatprep.subr.mxu0 0.0
      %280 = vmatpush1.msra.mxu0 0.0
      %281 = vmatprep.subr.mxu0 0.0
      %282 = vmatpush1.msra.mxu0 0.0
      %283 = vmatprep.subr.mxu0 0.0
      %284 = vmatpush1.msra.mxu0 0.0
      %285 = vmatprep.subr.mxu0 0.0
      %286 = vmatpush1.msra.mxu0 %v246
      %287 = vmatprep.subr.mxu0 0.0
      %288 = vmatpush1.msra.mxu0 %v245
      %289 = vmatprep.subr.mxu0 0.0
      %290 = vmatpush2.msra.mxu0 0.0
      %291 = vmatprep.subr.mxu0 0.0
      %292 = vmatpush2.msra.mxu0 0.0
      %293 = vmatprep.subr.mxu0 0.0
      %294 = vmatpush2.msra.mxu0 0.0
      %295 = vmatprep.subr.mxu0 0.0
      %296 = vmatpush2.msra.mxu0 0.0
      %297 = vmatprep.subr.mxu0 0.0
      %298 = vmatpush2.msra.mxu0 0.0
      %299 = vmatprep.subr.mxu0 0.0
      %300 = vmatpush2.msra.mxu0 0.0
      %301 = vmatprep.subr.mxu0 0.0
      %302 = vmatpush2.msra.mxu0 0.0
      %303 = vmatprep.subr.mxu0 0.0
      %304 = vmatpush2.msra.mxu0 0.0
      %305 = vmatprep.subr.mxu0 0.0
      %306 = vmatpush2.msra.mxu0 0.0
      %307 = vmatprep.subr.mxu0 0.0
      %308 = vmatpush2.msra.mxu0 0.0
      %309 = vmatprep.subr.mxu0 0.0
      %310 = vmatpush2.msra.mxu0 0.0
      %311 = vmatprep.subr.mxu0 0.0
      %312 = vmatpush2.msra.mxu0 0.0
      %313 = vmatprep.subr.mxu0 0.0
      %314 = vmatpush2.msra.mxu0 0.0
      %315 = vmatprep.subr.mxu0 0.0
      %316 = vmatpush2.msra.mxu0 0.0
      %317 = vmatprep.subr.mxu0 0.0
      %318 = vmatpush2.msra.mxu0 0.0
      %319 = vmatprep.subr.mxu0 0.0
      %320 = vmatpush2.msra.mxu0 0.0
      %321 = vmatprep.mubr.f32.mxu0 0.0
      %322 = vmatmul.mubr.f32.gmra.mxu0 %v255
      %v323 = vpop.f32.mrf.mxu0
      %v324 = vadd.f32 %v252, %v323
      %v325 = vpop.f32.mrf.mxu0
      %326 = vdwg.mxu0
      %327 = vst [vmem:[#allocation11] sm:$0xff] %v324
    $region41: #{tpu_custom_call.1} parent=1 // pred_fallthru
      _
    // Predicated region
    $region42: #{tpu_custom_call.1} parent=1 // pred_check
      _
    $region43: #{tpu_custom_call.1} parent=1 // pred_check_branch
      %329 = sbr.rel (0) target = $region45
    $region44: #{tpu_custom_call.1} parent=1 // pred_region
      %s331 = ssub.s32 128, 128
      %332 = vsyncadd [#allocation6], %s331
      %s334 = sshll.u32 [#allocation10], 4
      %s335 = int_to_ptr.vmem [resolvable:$true] %s334
      %337 = dma.vmem_to_hbm [thread:$0]  %s335, 128, %s5, [#allocation6]
    $region45: #{tpu_custom_call.1} parent=1 // pred_fallthru
      _
    // Predicated region
    $region46: #{tpu_custom_call.1} parent=1 // pred_check
      _
    $region47: #{tpu_custom_call.1} parent=1 // pred_check_branch
      %339 = sbr.rel (0) target = $region49
    $region48: #{tpu_custom_call.1} parent=1 // pred_region
      %s341 = ssub.s32 128, 128
      %342 = vsyncadd [#allocation12], %s341
      %s344 = sshll.u32 [#allocation11], 4
      %s345 = int_to_ptr.vmem [resolvable:$true] %s344
      %347 = dma.vmem_to_hbm [thread:$0]  %s345, 128, %s6, [#allocation12]
    $region49: #{tpu_custom_call.1} parent=1 // pred_fallthru
      _
    // Predicated region
    $region50: #{tpu_custom_call.1} parent=1 // pred_check
      _
    $region51: #{tpu_custom_call.1} parent=1 // pred_check_branch
      %349 = sbr.rel (0) target = $region53
    $region52: #{tpu_custom_call.1} parent=1 // pred_region
      %350 = dma.done [#allocation6], 128
    $region53: #{tpu_custom_call.1} parent=1 // pred_fallthru
      _
    // Predicated region
    $region54: #{tpu_custom_call.1} parent=1 // pred_check
      _
    $region55: #{tpu_custom_call.1} parent=1 // pred_check_branch
      %352 = sbr.rel (0) target = $region57
    $region56: #{tpu_custom_call.1} parent=1 // pred_region
      %353 = dma.done [#allocation12], 128
    $region57: #{tpu_custom_call.1} parent=1 // pred_fallthru
      _
    %354 = vsyncpa [#allocation5], 1
    %355 = vsyncpa [#allocation8], 1
    %356 = vsyncpa [#allocation6], 1
    %357 = vsyncpa [#allocation12], 1

</llo_original>
